<compile_context>
chip_gen: v7x
topology: tpu7x:2x2x1
jax: 0.10.0
libtpu: 0.0.40
codegen_flags: <defaults>
</compile_context>

<pallas_src>
import functools
import math

import jax
import jax.numpy as jnp
from jax.experimental import pallas as pl
from jax.experimental.pallas import tpu as pltpu

_LN2 = math.log(2.0)


def _tpu_info():
    fn = getattr(pltpu, "get_tpu_info", None)
    if fn is None:
        return None
    try:
        return fn()
    except Exception:
        return None


def _tensorcores_per_chip():
    """Best-effort TensorCores-per-chip detection; defaults to 1 (v5e/v6e)."""
    info = _tpu_info()
    if info is not None:
        for name in ("num_cores", "num_tensorcores", "tensorcores_per_chip",
                     "core_count"):
            n = getattr(info, name, None)
            if n is not None:
                try:
                    n = int(n)
                except (TypeError, ValueError):
                    continue
                if 1 <= n <= 8:
                    return n
    try:
        kind = jax.devices()[0].device_kind.lower()
    except Exception:
        return 1
    return 2 if "v7" in kind else 1


def _vmem_capacity_bytes():
    info = _tpu_info()
    if info is not None:
        cap = getattr(info, "vmem_capacity_bytes", None)
        if cap is not None:
            try:
                cap = int(cap)
            except (TypeError, ValueError):
                cap = 0
            if cap > 0:
                return cap
    return 64 << 20  # conservative: v7x per-TC VMEM (v5e/v6e have 128 MiB)


def _make_kernel(block_m, valid_m, kp, grid_m):
    """Reduction kernel over (R, block_m) tiles.

    acc_ref: (4, R, 128) f32 lane-wide accumulators:
       0: sigmoid(pred) * target   (intersection)
       1: sigmoid(pred)
       2: target
       3: |d| + log1p(exp(-2|d|))  (log-cosh without the ln2 constant)
    out_ref: (1, 4, R) f32, written only on the last reduction step of each p.
    """
    nb = block_m // 128
    has_ragged = (valid_m % block_m) != 0

    def kernel(pred_ref, tgt_ref, out_ref, acc_ref):
        p = pl.program_id(0)
        k = pl.program_id(1)

        @pl.when(k == 0)
        def _():
            acc_ref[...] = jnp.zeros_like(acc_ref)

        x = pred_ref[...].astype(jnp.float32)
        t = tgt_ref[...].astype(jnp.float32)
        rows = x.shape[0]

        s = jax.nn.sigmoid(x)
        ad = jnp.abs(s - t)
        # log(cosh(d)) = |d| + log1p(exp(-2|d|)) - ln2; the constant is folded
        # into the wrapper once (exact), and log1p is cheaper/safer than
        # log(1 + .).
        # TODO(synk): on v7x, replace log1p(exp(-2a)) with a VPU polynomial
        # fit to further relieve the single EUP slot.
        lc = ad + jnp.log1p(jnp.exp(-2.0 * ad))

        def fold(v):
            # (rows, block_m) -> (rows, 128): vreg-wise adds only (VPU), no XLU.
            return jnp.sum(v.reshape(rows, nb, 128), axis=1)

        def accum(sv, tv, lcv):
            acc_ref[0] += fold(sv * tv)
            acc_ref[1] += fold(sv)
            acc_ref[2] += fold(tv)
            acc_ref[3] += fold(lcv)

        def masked_streams():
            # Boundary blocks are padded with undefined data by Pallas, so
            # every stream (including the target) must be masked here.
            valid = valid_m - (p * kp + k) * block_m
            col = jax.lax.broadcasted_iota(jnp.int32, x.shape, 1)
            m = col < valid
            return (jnp.where(m, s, 0.0),
                    jnp.where(m, t, 0.0),
                    jnp.where(m, lc, 0.0))

        if not has_ragged:
            # All tiles are fully valid: never pay for masking.
            accum(s, t, lc)
        elif grid_m == 1:
            accum(*masked_streams())
        else:
            is_last = (p * kp + k) == (grid_m - 1)

            @pl.when(jnp.logical_not(is_last))
            def _():
                accum(s, t, lc)

            @pl.when(is_last)
            def _():
                accum(*masked_streams())

        @pl.when(k == kp - 1)
        def _():
            # Single deferred cross-lane reduce + one narrow store per p.
            out_ref[...] = jnp.sum(acc_ref[...], axis=-1)[None]

    return kernel


@functools.partial(jax.jit, static_argnames=("block_m",))
def lc_dice_loss(pred, target, alpha=1.0, beta=1.0, block_m=8192):
    """Pallas implementation of LcDiceLoss.forward.

    pred:   (B, C, H, W) float logits
    target: (B, C, H, W) float  OR  (B, 1, H, W) integer class labels
    """
    B, C = pred.shape[0], pred.shape[1]

    if pred.shape != target.shape:
        # One-hot built directly in NCHW via broadcast compare: avoids the
        # NHWC one_hot + transpose (a full extra HBM read+write); int8 keeps
        # target traffic at 1 B/elem.
        # TODO(synk): build the one-hot in-kernel from the int labels so only
        # 4 B/pixel of labels ever hit HBM.
        labels = jnp.squeeze(target, axis=1).astype(jnp.int32)        # (B,H,W)
        cls = jnp.arange(C, dtype=jnp.int32)
        tgt = (labels[:, None, :, :] == cls[None, :, None, None]).astype(jnp.int8)
    else:
        tgt = target  # keep native dtype; cast to f32 inside the kernel

    M = math.prod(pred.shape[1:])
    pred_2d = pred.reshape(B, M)
    tgt_2d = tgt.reshape(B, M)

    # Fill sublanes / grow the per-step tile: (B, M) -> (B*G, M//G), R up to 64.
    G = 1
    while B * G < 64 and M % (G * 2) == 0 and (M // (G * 2)) >= 128:
        G *= 2
    R = B * G
    Mg = M // G
    pred_r = pred_2d.reshape(R, Mg)
    tgt_r = tgt_2d.reshape(R, Mg)

    # Lane-aligned tile width; NO wrapper-side jnp.pad (the ragged last tile is
    # masked in-kernel instead of paying an extra HBM pass on both operands).
    in_itemsize = pred_r.dtype.itemsize + tgt_r.dtype.itemsize
    bm = min(block_m, pl.cdiv(Mg, 128) * 128)
    # Keep the double-buffered input footprint bounded (~24 MiB) for huge B.
    max_cols = ((24 << 20) // (2 * in_itemsize * R)) // 128 * 128
    bm = max(128, min(bm, max_cols))
    grid_m = pl.cdiv(Mg, bm)

    # Split the reduction across TensorCores only on multi-core chips (v7x);
    # on single-core v5e/v6e a second P slice is pure init/finalize overhead.
    cores = _tensorcores_per_chip()
    P = cores if (cores > 1 and grid_m >= cores and grid_m % cores == 0) else 1
    Kp = grid_m // P
    if P > 1 and hasattr(pltpu, "CORE_PARALLEL"):
        dim_sems = (pltpu.CORE_PARALLEL, pltpu.ARBITRARY)
    elif P > 1:
        dim_sems = ("parallel", "arbitrary")
    else:
        dim_sems = ("arbitrary", "arbitrary")

    # VMEM budget: 2 pipeline buffers per input tile + accumulator scratch,
    # clamped to 3/4 of this generation's physical per-core VMEM.
    need = 2 * R * bm * in_itemsize + 4 * R * 128 * 4 + (2 << 20)
    vmem_limit = int(min(max(need, 16 << 20), (_vmem_capacity_bytes() * 3) // 4))

    kernel = _make_kernel(bm, Mg, Kp, grid_m)

    out = pl.pallas_call(
        kernel,
        out_shape=jax.ShapeDtypeStruct((P, 4, R), jnp.float32),
        grid_spec=pltpu.PrefetchScalarGridSpec(
            num_scalar_prefetch=0,
            grid=(P, Kp),
            in_specs=[
                pl.BlockSpec((R, bm), lambda p, k: (0, p * Kp + k)),
                pl.BlockSpec((R, bm), lambda p, k: (0, p * Kp + k)),
            ],
            out_specs=pl.BlockSpec((1, 4, R), lambda p, k: (p, 0, 0)),
            scratch_shapes=[pltpu.VMEM((4, R, 128), jnp.float32)],
        ),
        compiler_params=pltpu.CompilerParams(
            dimension_semantics=dim_sems,
            vmem_limit_bytes=vmem_limit,
        ),
    )(pred_r, tgt_r)

    totals = jnp.sum(out, axis=0)                      # (4, R)
    per_batch = totals.reshape(4, B, G).sum(axis=-1)   # (4, B)
    intersection = per_batch[0]
    inp_sum = per_batch[1]
    tgt_sum = per_batch[2]
    lc_sum = per_batch[3]

    # Exactly B*M valid (unpadded) elements contribute; apply -ln2 once here.
    log_cosh_loss = jnp.sum(lc_sum) / (B * M) - _LN2
    dice = 1.0 - (2.0 * intersection + 1.0) / (inp_sum + tgt_sum + 1.0)
    dice_loss = jnp.mean(dice)
    return alpha * log_cosh_loss + beta * dice_loss


def _reference(pred, target, alpha=1.0, beta=1.0):
    B, C = pred.shape[0], pred.shape[1]
    if pred.shape != target.shape:
        tgt = jax.nn.one_hot(
            jnp.squeeze(target, axis=1).astype(jnp.int32), C, dtype=jnp.float32
        )
        tgt = jnp.transpose(tgt, (0, 3, 1, 2))
    else:
        tgt = target.astype(jnp.float32)
    x = jax.nn.sigmoid(pred.astype(jnp.float32)).reshape(B, -1)
    t = tgt.reshape(B, -1)
    log_cosh_loss = jnp.mean(jnp.log(jnp.cosh(x - t)))
    inter = jnp.sum(x * t, axis=1)
    dice = 1.0 - (2.0 * inter + 1.0) / (jnp.sum(x, axis=1) + jnp.sum(t, axis=1) + 1.0)
    return alpha * log_cosh_loss + beta * jnp.mean(dice)


if __name__ == "__main__":
    key = jax.random.PRNGKey(0)
    k1, k2, k3 = jax.random.split(key, 3)

    B, C, H, W = 2, 4, 16, 16  # M = C*H*W = 1024
    pred = jax.random.normal(k1, (B, C, H, W), dtype=jnp.float32)

    # Case 1: dense same-shape float targets
    target_dense = jax.random.uniform(k2, (B, C, H, W), dtype=jnp.float32)
    loss1 = jax.block_until_ready(lc_dice_loss(pred, target_dense))
    ref1 = jax.block_until_ready(_reference(pred, target_dense))

    # Case 2: integer label targets (triggers the NCHW one-hot glue path)
    target_lbl = jax.random.randint(k3, (B, 1, H, W), 0, C, dtype=jnp.int32)
    loss2 = jax.block_until_ready(lc_dice_loss(pred, target_lbl))
    ref2 = jax.block_until_ready(_reference(pred, target_lbl))

    assert jnp.allclose(loss1, ref1, atol=1e-5, rtol=1e-5), (loss1, ref1)
    assert jnp.allclose(loss2, ref2, atol=1e-5, rtol=1e-5), (loss2, ref2)
    print("KERNEL_OK")
</pallas_src>

<mosaic_0001>
module attributes {stable_mosaic.version = 11 : i64} {
  func.func @kernel(%arg0: i32, %arg1: i32, %arg2: memref<16x128xf32, #tpu.memory_space<vmem>>, %arg3: memref<16x128xf32, #tpu.memory_space<vmem>>, %arg4: memref<1x4x16xf32, #tpu.memory_space<vmem>>, %arg5: memref<4x16x128xf32, #tpu.memory_space<vmem>>) attributes {dimension_semantics = [#tpu.dimension_semantics<arbitrary>, #tpu.dimension_semantics<arbitrary>], iteration_bounds = array<i64: 1, 1>, scalar_prefetch = 0 : i64, scratch_operands = 1 : i64, tpu.core_type = #tpu.core_type<tc>, window_params = [{transform_indices = @transform_0, window_bounds = array<i64: 16, 128>}, {transform_indices = @transform_1, window_bounds = array<i64: 16, 128>}, {transform_indices = @transform_2, window_bounds = array<i64: 1, 4, 16>}]} {
    %c0_i32 = arith.constant 0 : i32
    %0 = arith.cmpi eq, %arg1, %c0_i32 : i32
    %1 = arith.extui %0 : i1 to i32
    %c0_i32_0 = arith.constant 0 : i32
    %2 = arith.cmpi ne, %1, %c0_i32_0 : i32
    scf.if %2 {
      %cst_32 = arith.constant 0.000000e+00 : f32
      %53 = vector.broadcast %cst_32 : f32 to vector<4x16x128xf32>
      %c0_33 = arith.constant 0 : index
      %c0_34 = arith.constant 0 : index
      %c0_35 = arith.constant 0 : index
      %54 = vector.load %arg5[%c0_33, %c0_34, %c0_35] : memref<4x16x128xf32, #tpu.memory_space<vmem>>, vector<4x16x128xf32>
      tpu.vector_store %arg5[%c0_33, %c0_34, %c0_35], %53 {strides = array<i32>} : memref<4x16x128xf32, #tpu.memory_space<vmem>>, vector<4x16x128xf32>,
    } else {
    }
    %c0 = arith.constant 0 : index
    %c0_1 = arith.constant 0 : index
    %3 = vector.load %arg2[%c0, %c0_1] : memref<16x128xf32, #tpu.memory_space<vmem>>, vector<16x128xf32>
    %c0_2 = arith.constant 0 : index
    %c0_3 = arith.constant 0 : index
    %4 = vector.load %arg3[%c0_2, %c0_3] : memref<16x128xf32, #tpu.memory_space<vmem>>, vector<16x128xf32>
    %5 = arith.negf %3 : vector<16x128xf32>
    %6 = math.exp %5 : vector<16x128xf32>
    %cst = arith.constant 1.000000e+00 : f32
    %7 = vector.broadcast %cst : f32 to vector<16x128xf32>
    %8 = arith.addf %7, %6 : vector<16x128xf32>
    %9 = arith.divf %7, %8 : vector<16x128xf32>
    %10 = arith.subf %9, %4 : vector<16x128xf32>
    %11 = math.absf %10 : vector<16x128xf32>
    %cst_4 = arith.constant -2.000000e+00 : f32
    %12 = vector.broadcast %cst_4 : f32 to vector<16x128xf32>
    %13 = arith.mulf %12, %11 : vector<16x128xf32>
    %14 = math.exp %13 : vector<16x128xf32>
    %15 = math.log1p %14 : vector<16x128xf32>
    %16 = arith.addf %11, %15 : vector<16x128xf32>
    %c0_5 = arith.constant 0 : index
    %c0_6 = arith.constant 0 : index
    %c0_7 = arith.constant 0 : index
    %17 = vector.load %arg5[%c0_5, %c0_6, %c0_7] : memref<4x16x128xf32, #tpu.memory_space<vmem>>, vector<1x16x128xf32>
    %18 = vector.shape_cast %17 : vector<1x16x128xf32> to vector<16x128xf32>
    %19 = arith.mulf %9, %4 : vector<16x128xf32>
    %20 = vector.shape_cast %19 : vector<16x128xf32> to vector<16x1x128xf32>
    %cst_8 = arith.constant dense<0.000000e+00> : vector<16x128xf32>
    %21 = vector.multi_reduction <add>, %20, %cst_8 [1] : vector<16x1x128xf32> to vector<16x128xf32>
    %22 = arith.addf %18, %21 : vector<16x128xf32>
    %c0_9 = arith.constant 0 : index
    %c0_10 = arith.constant 0 : index
    %c0_11 = arith.constant 0 : index
    %23 = vector.load %arg5[%c0_9, %c0_10, %c0_11] : memref<4x16x128xf32, #tpu.memory_space<vmem>>, vector<1x16x128xf32>
    %24 = vector.shape_cast %23 : vector<1x16x128xf32> to vector<16x128xf32>
    %25 = vector.shape_cast %22 : vector<16x128xf32> to vector<1x16x128xf32>
    tpu.vector_store %arg5[%c0_9, %c0_10, %c0_11], %25 {strides = array<i32>} : memref<4x16x128xf32, #tpu.memory_space<vmem>>, vector<1x16x128xf32>,
    %c1 = arith.constant 1 : index
    %c0_12 = arith.constant 0 : index
    %c0_13 = arith.constant 0 : index
    %26 = vector.load %arg5[%c1, %c0_12, %c0_13] : memref<4x16x128xf32, #tpu.memory_space<vmem>>, vector<1x16x128xf32>
    %27 = vector.shape_cast %26 : vector<1x16x128xf32> to vector<16x128xf32>
    %28 = vector.shape_cast %9 : vector<16x128xf32> to vector<16x1x128xf32>
    %cst_14 = arith.constant dense<0.000000e+00> : vector<16x128xf32>
    %29 = vector.multi_reduction <add>, %28, %cst_14 [1] : vector<16x1x128xf32> to vector<16x128xf32>
    %30 = arith.addf %27, %29 : vector<16x128xf32>
    %c1_15 = arith.constant 1 : index
    %c0_16 = arith.constant 0 : index
    %c0_17 = arith.constant 0 : index
    %31 = vector.load %arg5[%c1_15, %c0_16, %c0_17] : memref<4x16x128xf32, #tpu.memory_space<vmem>>, vector<1x16x128xf32>
    %32 = vector.shape_cast %31 : vector<1x16x128xf32> to vector<16x128xf32>
    %33 = vector.shape_cast %30 : vector<16x128xf32> to vector<1x16x128xf32>
    tpu.vector_store %arg5[%c1_15, %c0_16, %c0_17], %33 {strides = array<i32>} : memref<4x16x128xf32, #tpu.memory_space<vmem>>, vector<1x16x128xf32>,
    %c2 = arith.constant 2 : index
    %c0_18 = arith.constant 0 : index
    %c0_19 = arith.constant 0 : index
    %34 = vector.load %arg5[%c2, %c0_18, %c0_19] : memref<4x16x128xf32, #tpu.memory_space<vmem>>, vector<1x16x128xf32>
    %35 = vector.shape_cast %34 : vector<1x16x128xf32> to vector<16x128xf32>
    %36 = vector.shape_cast %4 : vector<16x128xf32> to vector<16x1x128xf32>
    %cst_20 = arith.constant dense<0.000000e+00> : vector<16x128xf32>
    %37 = vector.multi_reduction <add>, %36, %cst_20 [1] : vector<16x1x128xf32> to vector<16x128xf32>
    %38 = arith.addf %35, %37 : vector<16x128xf32>
    %c2_21 = arith.constant 2 : index
    %c0_22 = arith.constant 0 : index
    %c0_23 = arith.constant 0 : index
    %39 = vector.load %arg5[%c2_21, %c0_22, %c0_23] : memref<4x16x128xf32, #tpu.memory_space<vmem>>, vector<1x16x128xf32>
    %40 = vector.shape_cast %39 : vector<1x16x128xf32> to vector<16x128xf32>
    %41 = vector.shape_cast %38 : vector<16x128xf32> to vector<1x16x128xf32>
    tpu.vector_store %arg5[%c2_21, %c0_22, %c0_23], %41 {strides = array<i32>} : memref<4x16x128xf32, #tpu.memory_space<vmem>>, vector<1x16x128xf32>,
    %c3 = arith.constant 3 : index
    %c0_24 = arith.constant 0 : index
    %c0_25 = arith.constant 0 : index
    %42 = vector.load %arg5[%c3, %c0_24, %c0_25] : memref<4x16x128xf32, #tpu.memory_space<vmem>>, vector<1x16x128xf32>
    %43 = vector.shape_cast %42 : vector<1x16x128xf32> to vector<16x128xf32>
    %44 = vector.shape_cast %16 : vector<16x128xf32> to vector<16x1x128xf32>
    %cst_26 = arith.constant dense<0.000000e+00> : vector<16x128xf32>
    %45 = vector.multi_reduction <add>, %44, %cst_26 [1] : vector<16x1x128xf32> to vector<16x128xf32>
    %46 = arith.addf %43, %45 : vector<16x128xf32>
    %c3_27 = arith.constant 3 : index
    %c0_28 = arith.constant 0 : index
    %c0_29 = arith.constant 0 : index
    %47 = vector.load %arg5[%c3_27, %c0_28, %c0_29] : memref<4x16x128xf32, #tpu.memory_space<vmem>>, vector<1x16x128xf32>
    %48 = vector.shape_cast %47 : vector<1x16x128xf32> to vector<16x128xf32>
    %49 = vector.shape_cast %46 : vector<16x128xf32> to vector<1x16x128xf32>
    tpu.vector_store %arg5[%c3_27, %c0_28, %c0_29], %49 {strides = array<i32>} : memref<4x16x128xf32, #tpu.memory_space<vmem>>, vector<1x16x128xf32>,
    %c0_i32_30 = arith.constant 0 : i32
    %50 = arith.cmpi eq, %arg1, %c0_i32_30 : i32
    %51 = arith.extui %50 : i1 to i32
    %c0_i32_31 = arith.constant 0 : i32
    %52 = arith.cmpi ne, %51, %c0_i32_31 : i32
    scf.if %52 {
      %c0_32 = arith.constant 0 : index
      %c0_33 = arith.constant 0 : index
      %c0_34 = arith.constant 0 : index
      %53 = vector.load %arg5[%c0_32, %c0_33, %c0_34] : memref<4x16x128xf32, #tpu.memory_space<vmem>>, vector<4x16x128xf32>
      %cst_35 = arith.constant dense<0.000000e+00> : vector<4x16xf32>
      %54 = vector.multi_reduction <add>, %53, %cst_35 [2] : vector<4x16x128xf32> to vector<4x16xf32>
      %55 = vector.shape_cast %54 : vector<4x16xf32> to vector<1x4x16xf32>
      %c0_36 = arith.constant 0 : index
      %c0_37 = arith.constant 0 : index
      %c0_38 = arith.constant 0 : index
      %56 = vector.load %arg4[%c0_36, %c0_37, %c0_38] : memref<1x4x16xf32, #tpu.memory_space<vmem>>, vector<1x4x16xf32>
      tpu.vector_store %arg4[%c0_36, %c0_37, %c0_38], %55 {strides = array<i32>} : memref<1x4x16xf32, #tpu.memory_space<vmem>>, vector<1x4x16xf32>,
    } else {
    }
    return
  }
  func.func @transform_0(%arg0: i32, %arg1: i32) -> (i32, i32) {
    %c1_i32 = arith.constant 1 : i32
    %0 = arith.muli %arg0, %c1_i32 : i32
    %1 = arith.addi %0, %arg1 : i32
    %c0_i32 = arith.constant 0 : i32
    %c0_i32_0 = arith.constant 0 : i32
    return %c0_i32, %1 : i32, i32
  }
  func.func @transform_1(%arg0: i32, %arg1: i32) -> (i32, i32) {
    %c1_i32 = arith.constant 1 : i32
    %0 = arith.muli %arg0, %c1_i32 : i32
    %1 = arith.addi %0, %arg1 : i32
    %c0_i32 = arith.constant 0 : i32
    %c0_i32_0 = arith.constant 0 : i32
    return %c0_i32, %1 : i32, i32
  }
  func.func @transform_2(%arg0: i32, %arg1: i32) -> (i32, i32, i32) {
    %c0_i32 = arith.constant 0 : i32
    %c0_i32_0 = arith.constant 0 : i32
    %c0_i32_1 = arith.constant 0 : i32
    return %arg0, %c0_i32, %c0_i32_0 : i32, i32, i32
  }
}

</mosaic_0001>

<llo_original>
// kernel: lc_dice_loss.1
$region0: #{lc_dice_loss.1}
  #allocation0 [shape = 'u32[]', space=smem, size = 0x4, offset = 0x4, fixed_abs, tag = 'smem constant byte address 0x4 - core index']
  #allocation1 [shape = 'u32[144,128]{1,0:T(1,128)}', space=vmem, size = 0x12000, scoped, tag = 'internal scratch']
  #allocation2 [shape = 'f32[4,16,128]{2,1,0:T(8,128)}', space=vmem, size = 0x8000, scoped, tag = 'scratch operand']
  %s0 = inlined_call_operand.vmem [shape: f32[16,128], index: 0, kind: input, shape index: {}]
  %s1 = inlined_call_operand.vmem [shape: f32[16,128], index: 1, kind: input, shape index: {}]
  %s2 = inlined_call_operand.vmem [shape: f32[1,4,16], index: 2, kind: output, shape index: {}]
  %s3 = sld [smem:[#allocation0]]
  $region26: #{lc_dice_loss.1} parent=0
    _
  %s5 = ssub.s32 1, %s3
  %s6 = scalar_select 0, %s5, %s3
  // Predicated region
  $region2: #{lc_dice_loss.1} parent=0 // pred_check
    _
  $region3: #{lc_dice_loss.1} parent=0 // pred_check_branch
    %8 = sbr.rel (0) target = $region5
  $region4: #{lc_dice_loss.1} parent=0 // pred_region
    %s9 = sadd.s32 0, 0
    %p10 = scmp.lt.s32.totalorder %s9, 0
    %s11 = scalar_select %p10, %s9, 0
    %s12 = smul.addr %s11, 8
    %s13 = scalar_lea.vmem %s0, %s12
    %s14 = sadd.s32 0, 0
  $region5: #{lc_dice_loss.1} parent=0 // pred_fallthru
    _
  // Predicated region
  $region6: #{lc_dice_loss.1} parent=0 // pred_check
    _
  $region7: #{lc_dice_loss.1} parent=0 // pred_check_branch
    %16 = sbr.rel (0) target = $region9
  $region8: #{lc_dice_loss.1} parent=0 // pred_region
    %s17 = sadd.s32 0, 0
    %p18 = scmp.lt.s32.totalorder %s17, 0
    %s19 = scalar_select %p18, %s17, 0
    %s20 = smul.addr %s19, 8
    %s21 = scalar_lea.vmem %s1, %s20
    %s22 = sadd.s32 0, 0
  $region9: #{lc_dice_loss.1} parent=0 // pred_fallthru
    _
  %s23 = sadd.s32 0, 0
  %p24 = scmp.lt.s32.totalorder %s23, 0
  %s25 = scalar_select %p24, %s23, 0
  %s26 = smul.addr %s25, 8
  %s27 = scalar_lea.vmem %s0, %s26
  %s28 = sadd.s32 0, 0
  %p29 = scmp.lt.s32.totalorder %s28, 0
  %s30 = scalar_select %p29, %s28, 0
  %s31 = smul.addr %s30, 8
  %s32 = scalar_lea.vmem %s1, %s31
  %s33 = sadd.s32 0, 0
  %p34 = scmp.lt.s32.totalorder %s33, 0
  %s35 = scalar_select %p34, %s33, 0
  %s36 = smul.addr %s35, 8
  %s37 = scalar_lea.vmem %s0, %s36
  %s38 = sadd.s32 0, 0
  %s39 = sadd.s32 0, 0
  %p40 = scmp.lt.s32.totalorder %s39, 0
  %s41 = scalar_select %p40, %s39, 0
  %s42 = smul.addr %s41, 8
  %s43 = scalar_lea.vmem %s1, %s42
  %s44 = sadd.s32 0, 0
  %p45 = scmp.eq.s32.totalorder 0, 0
  // Predicated region
  $region10: #{lc_dice_loss.1} parent=0 // pred_check
    %p46 = pneg %p45
  $region11: #{lc_dice_loss.1} parent=0 // pred_check_branch
    %48 = sbr.rel (%p46) target = $region13
  $region12: #{lc_dice_loss.1} parent=0 // pred_region
    %49 = vst [vmem:[#allocation2] sm:$0xff] 0.0
    %50 = vst [vmem:[#allocation2 + $0x8] sm:$0xff] 0.0
    %51 = vst [vmem:[#allocation2 + $0x10] sm:$0xff] 0.0
    %52 = vst [vmem:[#allocation2 + $0x18] sm:$0xff] 0.0
    %53 = vst [vmem:[#allocation2 + $0x20] sm:$0xff] 0.0
    %54 = vst [vmem:[#allocation2 + $0x28] sm:$0xff] 0.0
    %55 = vst [vmem:[#allocation2 + $0x30] sm:$0xff] 0.0
    %56 = vst [vmem:[#allocation2 + $0x38] sm:$0xff] 0.0
  $region13: #{lc_dice_loss.1} parent=0 // pred_fallthru
    _
  %v57 = vld [vmem:[%s37] sm:$0xff]
  %v58 = vld [vmem:[%s37 + $0x8] sm:$0xff]
  %v59 = vld [vmem:[%s43] sm:$0xff]
  %v60 = vld [vmem:[%s43 + $0x8] sm:$0xff]
  %v61 = vxor.u32 %v57, 2147483648
  %v62 = vxor.u32 %v58, 2147483648
  %v63 = vmul.f32 %v61, 1.442695
  %v64 = vpow.pop %v63
  %v65 = vmul.f32 %v62, 1.442695
  %v66 = vpow.pop %v65
  %v67 = vadd.f32 %v64, 1.0
  %v68 = vadd.f32 %v66, 1.0
  %v69 = vrcp.pop %v67
  %v70 = vmul.f32 1.0, %v69
  %v71 = vrcp.pop %v68
  %v72 = vmul.f32 1.0, %v71
  %v73 = vsub.f32 %v70, %v59
  %v74 = vsub.f32 %v72, %v60
  %v75 = vand.u32 2147483647, %v73
  %v76 = vand.u32 2147483647, %v74
  %v77 = vmul.f32 %v75, -2.0
  %v78 = vmul.f32 %v76, -2.0
  %v79 = vmul.f32 %v77, 1.442695
  %v80 = vpow.pop %v79
  %v81 = vmul.f32 %v78, 1.442695
  %v82 = vpow.pop %v81
  %v83 = vadd.f32 %v80, 1.0
  %v84 = vlog2.pop %v83
  %v85 = vmul.f32 %v84, 0.6931472
  %v86 = vmul.f32 -0.5, %v80
  %v87 = vadd.f32 %v86, 1.0
  %v88 = vmul.f32 %v87, %v80
  %v89 = vand.u32 2147483647, %v80
  %vm90 = vcmp.lt.f32.partialorder %v89, 0.0004427343
  %v91 = vsel %vm90, %v88, %v85
  %v92 = vadd.f32 %v82, 1.0
  %v93 = vlog2.pop %v92
  %v94 = vmul.f32 %v93, 0.6931472
  %v95 = vmul.f32 -0.5, %v82
  %v96 = vadd.f32 %v95, 1.0
  %v97 = vmul.f32 %v96, %v82
  %v98 = vand.u32 2147483647, %v82
  %vm99 = vcmp.lt.f32.partialorder %v98, 0.0004427343
  %v100 = vsel %vm99, %v97, %v94
  %v101 = vadd.f32 %v75, %v91
  %v102 = vadd.f32 %v76, %v100
  %v103 = vld [vmem:[#allocation2] sm:$0xff]
  %v104 = vld [vmem:[#allocation2 + $0x8] sm:$0xff]
  %v105 = vmul.f32 %v70, %v59
  %v106 = vmul.f32 %v72, %v60
  %v107 = vadd.f32 %v105, 0.0
  %v108 = vadd.f32 %v106, 0.0
  %v109 = vadd.f32 %v103, %v107
  %v110 = vadd.f32 %v104, %v108
  %111 = vst [vmem:[#allocation2] sm:$0xff] %v109
  %112 = vst [vmem:[#allocation2 + $0x8] sm:$0xff] %v110
  %s113 = scalar_lea.vmem [#allocation2], 16
  %v114 = vld [vmem:[%s113] sm:$0xff]
  %v115 = vld [vmem:[%s113 + $0x8] sm:$0xff]
  %v116 = vadd.f32 %v70, 0.0
  %v117 = vadd.f32 %v72, 0.0
  %v118 = vadd.f32 %v114, %v116
  %v119 = vadd.f32 %v115, %v117
  %120 = vst [vmem:[%s113] sm:$0xff] %v118
  %121 = vst [vmem:[%s113 + $0x8] sm:$0xff] %v119
  %s122 = scalar_lea.vmem [#allocation2], 32
  %v123 = vld [vmem:[%s122] sm:$0xff]
  %v124 = vld [vmem:[%s122 + $0x8] sm:$0xff]
  %v125 = vadd.f32 %v59, 0.0
  %v126 = vadd.f32 %v60, 0.0
  %v127 = vadd.f32 %v123, %v125
  %v128 = vadd.f32 %v124, %v126
  %129 = vst [vmem:[%s122] sm:$0xff] %v127
  %130 = vst [vmem:[%s122 + $0x8] sm:$0xff] %v128
  %s131 = scalar_lea.vmem [#allocation2], 48
  %v132 = vld [vmem:[%s131] sm:$0xff]
  %v133 = vld [vmem:[%s131 + $0x8] sm:$0xff]
  %v134 = vadd.f32 %v101, 0.0
  %v135 = vadd.f32 %v102, 0.0
  %v136 = vadd.f32 %v132, %v134
  %v137 = vadd.f32 %v133, %v135
  %138 = vst [vmem:[%s131] sm:$0xff] %v136
  %139 = vst [vmem:[%s131 + $0x8] sm:$0xff] %v137
  // Predicated region
  $region14: #{lc_dice_loss.1} parent=0 // pred_check
    %p140 = pneg %p45
  $region15: #{lc_dice_loss.1} parent=0 // pred_check_branch
    %142 = sbr.rel (%p140) target = $region17
  $region16: #{lc_dice_loss.1} parent=0 // pred_region
    %v143 = vld [vmem:[#allocation2] sm:$0xff]
    %v144 = vld [vmem:[#allocation2 + $0x8] sm:$0xff]
    %v145 = vld [vmem:[#allocation2 + $0x10] sm:$0xff]
    %v146 = vld [vmem:[#allocation2 + $0x18] sm:$0xff]
    %v147 = vld [vmem:[#allocation2 + $0x20] sm:$0xff]
    %v148 = vld [vmem:[#allocation2 + $0x28] sm:$0xff]
    %v149 = vld [vmem:[#allocation2 + $0x30] sm:$0xff]
    %v150 = vld [vmem:[#allocation2 + $0x38] sm:$0xff]
    %151 = vadd.xlane.f32.xlu0 %v143
    %v152 = vpop.xlane.xlu0 %151
    %153 = vadd.xlane.f32.xlu0 %v144
    %v154 = vpop.xlane.xlu0 %153
    %155 = vadd.xlane.f32.xlu0 %v145
    %v156 = vpop.xlane.xlu0 %155
    %157 = vadd.xlane.f32.xlu0 %v146
    %v158 = vpop.xlane.xlu0 %157
    %159 = vadd.xlane.f32.xlu0 %v147
    %v160 = vpop.xlane.xlu0 %159
    %161 = vadd.xlane.f32.xlu0 %v148
    %v162 = vpop.xlane.xlu0 %161
    %163 = vadd.xlane.f32.xlu0 %v149
    %v164 = vpop.xlane.xlu0 %163
    %165 = vadd.xlane.f32.xlu0 %v150
    %v166 = vpop.xlane.xlu0 %165
    %v175 = vlaneseq
    %v176 = vand.u32 %v175, 127
    %v177 = vlaneseq
    %v178 = vshrl.u32 %v177, 7
    %v179 = vsub.s32 %v176, %v178
    %v180 = vrot.slane %v152, %v179
    %v181 = vadd.s32 %v176, 4294967288
    %v182 = vlaneseq
    %v183 = vshrl.u32 %v182, 7
    %v184 = vsub.s32 %v181, %v183
    %v185 = vrot.slane %v154, %v184
    %vm186 = vcmask 130112
    %v187 = vsel %vm186, %v185, %v180
    %v188 = vlaneseq
    %v189 = vshrl.u32 %v188, 7
    %v190 = vsub.s32 %v176, %v189
    %v191 = vrot.slane %v156, %v190
    %v192 = vlaneseq
    %v193 = vshrl.u32 %v192, 7
    %v194 = vsub.s32 %v181, %v193
    %v195 = vrot.slane %v158, %v194
    %v196 = vsel %vm186, %v195, %v191
    %v197 = vlaneseq
    %v198 = vshrl.u32 %v197, 7
    %v199 = vsub.s32 %v176, %v198
    %v200 = vrot.slane %v160, %v199
    %v201 = vlaneseq
    %v202 = vshrl.u32 %v201, 7
    %v203 = vsub.s32 %v181, %v202
    %v204 = vrot.slane %v162, %v203
    %v205 = vsel %vm186, %v204, %v200
    %v206 = vlaneseq
    %v207 = vshrl.u32 %v206, 7
    %v208 = vsub.s32 %v176, %v207
    %v209 = vrot.slane %v164, %v208
    %v210 = vlaneseq
    %v211 = vshrl.u32 %v210, 7
    %v212 = vsub.s32 %v181, %v211
    %v213 = vrot.slane %v166, %v212
    %v214 = vsel %vm186, %v213, %v209
    %vm215 = vcmask 1041409
    %v216 = vsel %vm215, %v196, %v187
    %vm217 = vcmask 1042434
    %v218 = vsel %vm217, %v205, %v216
    %vm219 = vcmask 1043459
    %v220 = vsel %vm219, %v214, %v218
    %vm222 = vcmask 125952
    %223 = vst.msk [vmem:[%s2] sm:$0xf] %vm222, %v220
  $region17: #{lc_dice_loss.1} parent=0 // pred_fallthru
    _
  // Predicated region
  $region18: #{lc_dice_loss.1} parent=0 // pred_check
    _
  $region19: #{lc_dice_loss.1} parent=0 // pred_check_branch
    %225 = sbr.rel (0) target = $region21
  $region20: #{lc_dice_loss.1} parent=0 // pred_region
    _
  $region21: #{lc_dice_loss.1} parent=0 // pred_fallthru
    _
  // Predicated region
  $region22: #{lc_dice_loss.1} parent=0 // pred_check
    _
  $region23: #{lc_dice_loss.1} parent=0 // pred_check_branch
    %227 = sbr.rel (0) target = $region25
  $region24: #{lc_dice_loss.1} parent=0 // pred_region
    _
  $region25: #{lc_dice_loss.1} parent=0 // pred_fallthru
    _

</llo_original>
